<compile_context>
chip_gen: v5e
topology: v5e:2x2
jax: 0.10.0
libtpu: 0.0.40
codegen_flags: <defaults>
</compile_context>

<pallas_src>
import functools

import jax
import jax.numpy as jnp
from jax.experimental import pallas as pl
from jax.experimental.pallas import tpu as pltpu

EPS = 1e-5  # PyTorch BatchNorm2d default eps


# ----------------------------- kernel helpers --------------------------------
def _conv1x1(w_ref, inp):
    """1x1 conv as VPU broadcast-FMAs: out[f, p] = sum_c w[f, c] * inp[c, p].

    w_ref: (F_out, C_in) VMEM ref (tiny).  inp: (C_in, TILE) f32 array.
    Channel counts are tiny, so this stays entirely off the MXU and keeps the
    (memory-bound) kernel in the load / VALU / store slots.
    """
    w = w_ref[...]
    c_in = inp.shape[0]
    acc = w[:, 0:1] * inp[0:1, :]
    for c in range(1, c_in):
        acc = acc + w[:, c:c + 1] * inp[c:c + 1, :]
    return acc


# ------------------------------ stats kernel ---------------------------------
def _stats_kernel(g_ref, x_ref, wg_ref, wx_ref, wp_ref, bn_gx_ref, bn_p_ref,
                  gx_aff_ref, p_aff_ref,
                  s_g, ss_g, s_x, ss_x, s_p, ss_p, *, inv_p):
    """grid = (phase=2, N, T).

    phase 0: accumulate per-channel sum / sumsq of g1 = Wg*g and x1 = Wx*x.
    phase 1: normalize g1/x1 with the batch stats, form a = relu(.), project to
             p = Wp*a and accumulate its sum / sumsq; at the final grid step
             fold everything into per-channel (scale, shift) affine outputs.
    """
    ph = pl.program_id(0)
    n = pl.program_id(1)
    t = pl.program_id(2)

    @pl.when((ph == 0) & (n == 0) & (t == 0))
    def _init():
        for ref in (s_g, ss_g, s_x, ss_x, s_p, ss_p):
            ref[...] = jnp.zeros_like(ref)

    g1 = _conv1x1(wg_ref, g_ref[...])        # (F_int, TILE)
    x1 = _conv1x1(wx_ref, x_ref[...])        # (F_int, TILE)

    @pl.when(ph == 0)
    def _accum_gx():
        s_g[...] += jnp.sum(g1, axis=1, keepdims=True)
        ss_g[...] += jnp.sum(g1 * g1, axis=1, keepdims=True)
        s_x[...] += jnp.sum(x1, axis=1, keepdims=True)
        ss_x[...] += jnp.sum(x1 * x1, axis=1, keepdims=True)

    @pl.when(ph == 1)
    def _accum_p():
        bn_gx = bn_gx_ref[...]               # cols: [gamma_g, beta_g, gamma_x, beta_x]
        mu_g = s_g[...] * inv_p
        var_g = ss_g[...] * inv_p - mu_g * mu_g
        sc_g = bn_gx[:, 0:1] * jax.lax.rsqrt(var_g + EPS)
        sh_g = bn_gx[:, 1:2] - mu_g * sc_g
        mu_x = s_x[...] * inv_p
        var_x = ss_x[...] * inv_p - mu_x * mu_x
        sc_x = bn_gx[:, 2:3] * jax.lax.rsqrt(var_x + EPS)
        sh_x = bn_gx[:, 3:4] - mu_x * sc_x

        a = jnp.maximum(g1 * sc_g + sh_g + x1 * sc_x + sh_x, 0.0)
        p = jnp.sum(a * wp_ref[...], axis=0, keepdims=True)     # (1, TILE)
        s_p[...] += jnp.sum(p, axis=1, keepdims=True)
        ss_p[...] += jnp.sum(p * p, axis=1, keepdims=True)

        is_last = (n == pl.num_programs(1) - 1) & (t == pl.num_programs(2) - 1)

        @pl.when(is_last)
        def _finalize():
            bn_p = bn_p_ref[...]             # cols: [gamma_p, beta_p]
            mu_p = s_p[...] * inv_p
            var_p = ss_p[...] * inv_p - mu_p * mu_p
            sc_p = bn_p[:, 0:1] * jax.lax.rsqrt(var_p + EPS)
            sh_p = bn_p[:, 1:2] - mu_p * sc_p
            gx_aff_ref[:, 0:1] = sc_g
            gx_aff_ref[:, 1:2] = sh_g
            gx_aff_ref[:, 2:3] = sc_x
            gx_aff_ref[:, 3:4] = sh_x
            p_aff_ref[:, 0:1] = sc_p
            p_aff_ref[:, 1:2] = sh_p


# ------------------------------ apply kernel ---------------------------------
def _apply_kernel(g_ref, x_ref, wg_ref, wx_ref, wp_ref, gx_aff_ref, p_aff_ref,
                  out_ref):
    """grid = (N, T), fully parallel: normalize, relu, psi projection, gate."""
    x = x_ref[...]                                        # (Cx, TILE)
    g1 = _conv1x1(wg_ref, g_ref[...])                     # (F_int, TILE)
    x1 = _conv1x1(wx_ref, x)                              # (F_int, TILE)
    aff = gx_aff_ref[...]                                 # (F_int, 4)
    a = jnp.maximum(g1 * aff[:, 0:1] + aff[:, 1:2]
                    + x1 * aff[:, 2:3] + aff[:, 3:4], 0.0)
    p = jnp.sum(a * wp_ref[...], axis=0, keepdims=True)   # (1, TILE)
    paff = p_aff_ref[...]                                 # (1, 2)
    psi = jax.nn.sigmoid(p * paff[:, 0:1] + paff[:, 1:2])
    out_ref[...] = (x * psi).astype(out_ref.dtype)        # psi broadcasts over channels


# --------------------------------- wrapper -----------------------------------
def _pick_tile(hw: int, cap: int = 2048) -> int:
    """Largest multiple of 128 <= cap that divides hw; else the full extent."""
    top = (min(cap, hw) // 128) * 128
    for cand in range(top, 0, -128):
        if hw % cand == 0:
            return cand
    return hw


def attention_block_atlas(g_nchw, x_nchw, params, *, tile_cap=2048):
    """g_nchw: (N, F_l, H, W), x_nchw: (N, F_g, H, W) float32 -> NCHW float32."""
    N, Cl, H, W = g_nchw.shape
    _, Cx, _, _ = x_nchw.shape
    HW = H * W
    P = N * HW
    TILE = _pick_tile(HW, tile_cap)
    T = HW // TILE
    F_int = params["wg"].shape[0]

    # NCHW -> (N, C, HW): pure reshape, no HBM transpose. Channels sit on the
    # sublane axis, pixels on the lane axis (lane-dense loads/stores).
    g3 = g_nchw.reshape(N, Cl, HW)
    x3 = x_nchw.reshape(N, Cx, HW)

    wg = params["wg"].astype(jnp.float32)                       # (F_int, Cl) torch layout
    wx = params["wx"].astype(jnp.float32)                       # (F_int, Cx)
    wp = params["wp"].reshape(F_int, 1).astype(jnp.float32)     # psi weight as a column
    bn_gx = jnp.stack([params["gg"], params["betg"],
                       params["gx"], params["betx"]], axis=1).astype(jnp.float32)  # (F_int,4)
    bn_p = jnp.stack([params["gp"], params["betp"]], axis=1).astype(jnp.float32)   # (1,2)
    # NOTE: conv biases bg/bx/bp are intentionally NOT passed: they cancel
    # exactly inside training-mode BatchNorm.

    vmem_limit = 32 * 1024 * 1024

    # ---- pass 1: batch statistics, folded into per-channel scale/shift ----
    gx_aff, p_aff = pl.pallas_call(
        functools.partial(_stats_kernel, inv_p=1.0 / float(P)),
        out_shape=(jax.ShapeDtypeStruct((F_int, 4), jnp.float32),
                   jax.ShapeDtypeStruct((1, 2), jnp.float32)),
        grid=(2, N, T),
        in_specs=[
            pl.BlockSpec((None, Cl, TILE), lambda ph, n, t: (n, 0, t)),
            pl.BlockSpec((None, Cx, TILE), lambda ph, n, t: (n, 0, t)),
            pl.BlockSpec((F_int, Cl), lambda ph, n, t: (0, 0)),
            pl.BlockSpec((F_int, Cx), lambda ph, n, t: (0, 0)),
            pl.BlockSpec((F_int, 1), lambda ph, n, t: (0, 0)),
            pl.BlockSpec((F_int, 4), lambda ph, n, t: (0, 0)),
            pl.BlockSpec((1, 2), lambda ph, n, t: (0, 0)),
        ],
        out_specs=(
            pl.BlockSpec((F_int, 4), lambda ph, n, t: (0, 0)),
            pl.BlockSpec((1, 2), lambda ph, n, t: (0, 0)),
        ),
        scratch_shapes=[pltpu.VMEM((F_int, 1), jnp.float32)] * 4
                       + [pltpu.VMEM((1, 1), jnp.float32)] * 2,
        compiler_params=pltpu.CompilerParams(
            dimension_semantics=("arbitrary", "arbitrary", "arbitrary"),
            vmem_limit_bytes=vmem_limit),
        cost_estimate=pl.CostEstimate(
            flops=4 * P * F_int * (Cl + Cx + 1),
            transcendentals=2 * F_int + 1,
            bytes_accessed=8 * P * (Cl + Cx)),
    )(g3, x3, wg, wx, wp, bn_gx, bn_p)

    # ---- pass 2: apply (embarrassingly parallel over (N, HW) tiles) ----
    out3 = pl.pallas_call(
        _apply_kernel,
        out_shape=jax.ShapeDtypeStruct((N, Cx, HW), jnp.float32),
        grid=(N, T),
        in_specs=[
            pl.BlockSpec((None, Cl, TILE), lambda n, t: (n, 0, t)),
            pl.BlockSpec((None, Cx, TILE), lambda n, t: (n, 0, t)),
            pl.BlockSpec((F_int, Cl), lambda n, t: (0, 0)),
            pl.BlockSpec((F_int, Cx), lambda n, t: (0, 0)),
            pl.BlockSpec((F_int, 1), lambda n, t: (0, 0)),
            pl.BlockSpec((F_int, 4), lambda n, t: (0, 0)),
            pl.BlockSpec((1, 2), lambda n, t: (0, 0)),
        ],
        out_specs=pl.BlockSpec((None, Cx, TILE), lambda n, t: (n, 0, t)),
        compiler_params=pltpu.CompilerParams(
            dimension_semantics=("parallel", "parallel"),
            vmem_limit_bytes=vmem_limit),
        cost_estimate=pl.CostEstimate(
            flops=2 * P * F_int * (Cl + Cx + 1) + 4 * P * Cx,
            transcendentals=P,
            bytes_accessed=4 * P * (Cl + 2 * Cx)),
    )(g3, x3, wg, wx, wp, gx_aff, p_aff)

    return out3.reshape(N, Cx, H, W)


# ---------------- pure-JAX reference (NCHW, mirrors PyTorch math) -------------
def _conv1x1_nchw(inp, w_oc_ic, b):
    return jnp.einsum("nchw,dc->ndhw", inp, w_oc_ic) + b.reshape(1, -1, 1, 1)


def _bn_train_nchw(inp, gamma, beta):
    mu = jnp.mean(inp, axis=(0, 2, 3), keepdims=True)
    var = jnp.mean((inp - mu) ** 2, axis=(0, 2, 3), keepdims=True)
    return (inp - mu) * jax.lax.rsqrt(var + EPS) * gamma.reshape(1, -1, 1, 1) \
        + beta.reshape(1, -1, 1, 1)


def _reference(g, x, p):
    g1 = _bn_train_nchw(_conv1x1_nchw(g, p["wg"], p["bg"]), p["gg"], p["betg"])
    x1 = _bn_train_nchw(_conv1x1_nchw(x, p["wx"], p["bx"]), p["gx"], p["betx"])
    a = jnp.maximum(g1 + x1, 0.0)
    psi = jax.nn.sigmoid(
        _bn_train_nchw(_conv1x1_nchw(a, p["wp"], p["bp"]), p["gp"], p["betp"]))
    return x * psi


if __name__ == "__main__":
    # W_g (in_channels=F_l) is applied to `g` in the PyTorch forward, so the
    # module only type-checks when the spatial/channel wiring is consistent;
    # we use F_g = F_l = 4 as before.
    N, F_g, F_l, F_int, H, W = 2, 4, 4, 8, 16, 16

    key = jax.random.PRNGKey(0)
    ks = jax.random.split(key, 16)

    g = jax.random.normal(ks[0], (N, F_l, H, W), jnp.float32)
    x = jax.random.normal(ks[1], (N, F_g, H, W), jnp.float32)

    # Conv weights stored in torch layout (C_out, C_in) (kernel_size=1 squeezed).
    params = dict(
        wg=0.2 * jax.random.normal(ks[2], (F_int, F_l), jnp.float32),
        bg=0.1 * jax.random.normal(ks[3], (F_int,), jnp.float32),
        gg=1.0 + 0.1 * jax.random.normal(ks[4], (F_int,), jnp.float32),
        betg=0.1 * jax.random.normal(ks[5], (F_int,), jnp.float32),
        wx=0.2 * jax.random.normal(ks[6], (F_int, F_g), jnp.float32),
        bx=0.1 * jax.random.normal(ks[7], (F_int,), jnp.float32),
        gx=1.0 + 0.1 * jax.random.normal(ks[8], (F_int,), jnp.float32),
        betx=0.1 * jax.random.normal(ks[9], (F_int,), jnp.float32),
        wp=0.2 * jax.random.normal(ks[10], (1, F_int), jnp.float32),
        bp=0.1 * jax.random.normal(ks[11], (1,), jnp.float32),
        gp=1.0 + 0.1 * jax.random.normal(ks[12], (1,), jnp.float32),
        betp=0.1 * jax.random.normal(ks[13], (1,), jnp.float32),
    )

    out = attention_block_atlas(g, x, params)
    jax.block_until_ready(out)

    ref = _reference(g, x, params)
    assert out.shape == x.shape and out.dtype == jnp.float32
    assert jnp.allclose(out, ref, atol=2e-4, rtol=2e-4), "mismatch vs reference"

    print("KERNEL_OK")
</pallas_src>

<mosaic_0001>
module attributes {stable_mosaic.version = 11 : i64} {
  func.func @_stats_kernel(%arg0: i32, %arg1: i32, %arg2: i32, %arg3: memref<1x4x256xf32, #tpu.memory_space<vmem>>, %arg4: memref<1x4x256xf32, #tpu.memory_space<vmem>>, %arg5: memref<8x4xf32, #tpu.memory_space<vmem>>, %arg6: memref<8x4xf32, #tpu.memory_space<vmem>>, %arg7: memref<8x1xf32, #tpu.memory_space<vmem>>, %arg8: memref<8x4xf32, #tpu.memory_space<vmem>>, %arg9: memref<1x2xf32, #tpu.memory_space<vmem>>, %arg10: memref<8x4xf32, #tpu.memory_space<vmem>>, %arg11: memref<1x2xf32, #tpu.memory_space<vmem>>, %arg12: memref<8x1xf32, #tpu.memory_space<vmem>>, %arg13: memref<8x1xf32, #tpu.memory_space<vmem>>, %arg14: memref<8x1xf32, #tpu.memory_space<vmem>>, %arg15: memref<8x1xf32, #tpu.memory_space<vmem>>, %arg16: memref<1x1xf32, #tpu.memory_space<vmem>>, %arg17: memref<1x1xf32, #tpu.memory_space<vmem>>) attributes {dimension_semantics = [#tpu.dimension_semantics<arbitrary>, #tpu.dimension_semantics<arbitrary>, #tpu.dimension_semantics<arbitrary>], iteration_bounds = array<i64: 2, 2, 1>, scalar_prefetch = 0 : i64, scratch_operands = 6 : i64, tpu.core_type = #tpu.core_type<tc>, window_params = [{transform_indices = @transform_0, window_bounds = array<i64: 1, 4, 256>}, {transform_indices = @transform_1, window_bounds = array<i64: 1, 4, 256>}, {pipeline_mode = #tpu.pipeline_mode<synchronous>, transform_indices = @transform_2, window_bounds = array<i64: 8, 4>}, {pipeline_mode = #tpu.pipeline_mode<synchronous>, transform_indices = @transform_3, window_bounds = array<i64: 8, 4>}, {pipeline_mode = #tpu.pipeline_mode<synchronous>, transform_indices = @transform_4, window_bounds = array<i64: 8, 1>}, {pipeline_mode = #tpu.pipeline_mode<synchronous>, transform_indices = @transform_5, window_bounds = array<i64: 8, 4>}, {pipeline_mode = #tpu.pipeline_mode<synchronous>, transform_indices = @transform_6, window_bounds = array<i64: 1, 2>}, {pipeline_mode = #tpu.pipeline_mode<synchronous>, transform_indices = @transform_7, window_bounds = array<i64: 8, 4>}, {pipeline_mode = #tpu.pipeline_mode<synchronous>, transform_indices = @transform_8, window_bounds = array<i64: 1, 2>}]} {
    %c0_i32 = arith.constant 0 : i32
    %0 = arith.cmpi eq, %arg0, %c0_i32 : i32
    %c0_i32_0 = arith.constant 0 : i32
    %1 = arith.cmpi eq, %arg1, %c0_i32_0 : i32
    %2 = arith.andi %0, %1 : i1
    %c0_i32_1 = arith.constant 0 : i32
    %3 = arith.cmpi eq, %arg2, %c0_i32_1 : i32
    %4 = arith.andi %2, %3 : i1
    %5 = arith.extui %4 : i1 to i32
    %c0_i32_2 = arith.constant 0 : i32
    %6 = arith.cmpi ne, %5, %c0_i32_2 : i32
    scf.if %6 {
      %cst = arith.constant 0.000000e+00 : f32
      %65 = vector.broadcast %cst : f32 to vector<8x1xf32>
      %c0_15 = arith.constant 0 : index
      %c0_16 = arith.constant 0 : index
      %66 = vector.load %arg12[%c0_15, %c0_16] : memref<8x1xf32, #tpu.memory_space<vmem>>, vector<8x1xf32>
      tpu.vector_store %arg12[%c0_15, %c0_16], %65 {strides = array<i32>} : memref<8x1xf32, #tpu.memory_space<vmem>>, vector<8x1xf32>,
      %cst_17 = arith.constant 0.000000e+00 : f32
      %67 = vector.broadcast %cst_17 : f32 to vector<8x1xf32>
      %c0_18 = arith.constant 0 : index
      %c0_19 = arith.constant 0 : index
      %68 = vector.load %arg13[%c0_18, %c0_19] : memref<8x1xf32, #tpu.memory_space<vmem>>, vector<8x1xf32>
      tpu.vector_store %arg13[%c0_18, %c0_19], %67 {strides = array<i32>} : memref<8x1xf32, #tpu.memory_space<vmem>>, vector<8x1xf32>,
      %cst_20 = arith.constant 0.000000e+00 : f32
      %69 = vector.broadcast %cst_20 : f32 to vector<8x1xf32>
      %c0_21 = arith.constant 0 : index
      %c0_22 = arith.constant 0 : index
      %70 = vector.load %arg14[%c0_21, %c0_22] : memref<8x1xf32, #tpu.memory_space<vmem>>, vector<8x1xf32>
      tpu.vector_store %arg14[%c0_21, %c0_22], %69 {strides = array<i32>} : memref<8x1xf32, #tpu.memory_space<vmem>>, vector<8x1xf32>,
      %cst_23 = arith.constant 0.000000e+00 : f32
      %71 = vector.broadcast %cst_23 : f32 to vector<8x1xf32>
      %c0_24 = arith.constant 0 : index
      %c0_25 = arith.constant 0 : index
      %72 = vector.load %arg15[%c0_24, %c0_25] : memref<8x1xf32, #tpu.memory_space<vmem>>, vector<8x1xf32>
      tpu.vector_store %arg15[%c0_24, %c0_25], %71 {strides = array<i32>} : memref<8x1xf32, #tpu.memory_space<vmem>>, vector<8x1xf32>,
      %cst_26 = arith.constant 0.000000e+00 : f32
      %73 = vector.broadcast %cst_26 : f32 to vector<1x1xf32>
      %c0_27 = arith.constant 0 : index
      %c0_28 = arith.constant 0 : index
      %74 = vector.load %arg16[%c0_27, %c0_28] : memref<1x1xf32, #tpu.memory_space<vmem>>, vector<1x1xf32>
      tpu.vector_store %arg16[%c0_27, %c0_28], %73 {strides = array<i32>} : memref<1x1xf32, #tpu.memory_space<vmem>>, vector<1x1xf32>,
      %cst_29 = arith.constant 0.000000e+00 : f32
      %75 = vector.broadcast %cst_29 : f32 to vector<1x1xf32>
      %c0_30 = arith.constant 0 : index
      %c0_31 = arith.constant 0 : index
      %76 = vector.load %arg17[%c0_30, %c0_31] : memref<1x1xf32, #tpu.memory_space<vmem>>, vector<1x1xf32>
      tpu.vector_store %arg17[%c0_30, %c0_31], %75 {strides = array<i32>} : memref<1x1xf32, #tpu.memory_space<vmem>>, vector<1x1xf32>,
    } else {
    }
    %c0 = arith.constant 0 : index
    %c0_3 = arith.constant 0 : index
    %c0_4 = arith.constant 0 : index
    %7 = vector.load %arg3[%c0, %c0_3, %c0_4] : memref<1x4x256xf32, #tpu.memory_space<vmem>>, vector<1x4x256xf32>
    %8 = vector.shape_cast %7 : vector<1x4x256xf32> to vector<4x256xf32>
    %c0_5 = arith.constant 0 : index
    %c0_6 = arith.constant 0 : index
    %9 = vector.load %arg5[%c0_5, %c0_6] : memref<8x4xf32, #tpu.memory_space<vmem>>, vector<8x4xf32>
    %10 = vector.extract_strided_slice %9 {offsets = [0, 0], sizes = [8, 1], strides = [1, 1]} : vector<8x4xf32> to vector<8x1xf32>
    %11 = vector.extract_strided_slice %8 {offsets = [0, 0], sizes = [1, 256], strides = [1, 1]} : vector<4x256xf32> to vector<1x256xf32>
    %12 = vector.broadcast %10 : vector<8x1xf32> to vector<8x256xf32>
    %13 = vector.broadcast %11 : vector<1x256xf32> to vector<8x256xf32>
    %14 = arith.mulf %12, %13 : vector<8x256xf32>
    %15 = vector.extract_strided_slice %9 {offsets = [0, 1], sizes = [8, 1], strides = [1, 1]} : vector<8x4xf32> to vector<8x1xf32>
    %16 = vector.extract_strided_slice %8 {offsets = [1, 0], sizes = [1, 256], strides = [1, 1]} : vector<4x256xf32> to vector<1x256xf32>
    %17 = vector.broadcast %15 : vector<8x1xf32> to vector<8x256xf32>
    %18 = vector.broadcast %16 : vector<1x256xf32> to vector<8x256xf32>
    %19 = arith.mulf %17, %18 : vector<8x256xf32>
    %20 = arith.addf %14, %19 : vector<8x256xf32>
    %21 = vector.extract_strided_slice %9 {offsets = [0, 2], sizes = [8, 1], strides = [1, 1]} : vector<8x4xf32> to vector<8x1xf32>
    %22 = vector.extract_strided_slice %8 {offsets = [2, 0], sizes = [1, 256], strides = [1, 1]} : vector<4x256xf32> to vector<1x256xf32>
    %23 = vector.broadcast %21 : vector<8x1xf32> to vector<8x256xf32>
    %24 = vector.broadcast %22 : vector<1x256xf32> to vector<8x256xf32>
    %25 = arith.mulf %23, %24 : vector<8x256xf32>
    %26 = arith.addf %20, %25 : vector<8x256xf32>
    %27 = vector.extract_strided_slice %9 {offsets = [0, 3], sizes = [8, 1], strides = [1, 1]} : vector<8x4xf32> to vector<8x1xf32>
    %28 = vector.extract_strided_slice %8 {offsets = [3, 0], sizes = [1, 256], strides = [1, 1]} : vector<4x256xf32> to vector<1x256xf32>
    %29 = vector.broadcast %27 : vector<8x1xf32> to vector<8x256xf32>
    %30 = vector.broadcast %28 : vector<1x256xf32> to vector<8x256xf32>
    %31 = arith.mulf %29, %30 : vector<8x256xf32>
    %32 = arith.addf %26, %31 : vector<8x256xf32>
    %c0_7 = arith.constant 0 : index
    %c0_8 = arith.constant 0 : index
    %c0_9 = arith.constant 0 : index
    %33 = vector.load %arg4[%c0_7, %c0_8, %c0_9] : memref<1x4x256xf32, #tpu.memory_space<vmem>>, vector<1x4x256xf32>
    %34 = vector.shape_cast %33 : vector<1x4x256xf32> to vector<4x256xf32>
    %c0_10 = arith.constant 0 : index
    %c0_11 = arith.constant 0 : index
    %35 = vector.load %arg6[%c0_10, %c0_11] : memref<8x4xf32, #tpu.memory_space<vmem>>, vector<8x4xf32>
    %36 = vector.extract_strided_slice %35 {offsets = [0, 0], sizes = [8, 1], strides = [1, 1]} : vector<8x4xf32> to vector<8x1xf32>
    %37 = vector.extract_strided_slice %34 {offsets = [0, 0], sizes = [1, 256], strides = [1, 1]} : vector<4x256xf32> to vector<1x256xf32>
    %38 = vector.broadcast %36 : vector<8x1xf32> to vector<8x256xf32>
    %39 = vector.broadcast %37 : vector<1x256xf32> to vector<8x256xf32>
    %40 = arith.mulf %38, %39 : vector<8x256xf32>
    %41 = vector.extract_strided_slice %35 {offsets = [0, 1], sizes = [8, 1], strides = [1, 1]} : vector<8x4xf32> to vector<8x1xf32>
    %42 = vector.extract_strided_slice %34 {offsets = [1, 0], sizes = [1, 256], strides = [1, 1]} : vector<4x256xf32> to vector<1x256xf32>
    %43 = vector.broadcast %41 : vector<8x1xf32> to vector<8x256xf32>
    %44 = vector.broadcast %42 : vector<1x256xf32> to vector<8x256xf32>
    %45 = arith.mulf %43, %44 : vector<8x256xf32>
    %46 = arith.addf %40, %45 : vector<8x256xf32>
    %47 = vector.extract_strided_slice %35 {offsets = [0, 2], sizes = [8, 1], strides = [1, 1]} : vector<8x4xf32> to vector<8x1xf32>
    %48 = vector.extract_strided_slice %34 {offsets = [2, 0], sizes = [1, 256], strides = [1, 1]} : vector<4x256xf32> to vector<1x256xf32>
    %49 = vector.broadcast %47 : vector<8x1xf32> to vector<8x256xf32>
    %50 = vector.broadcast %48 : vector<1x256xf32> to vector<8x256xf32>
    %51 = arith.mulf %49, %50 : vector<8x256xf32>
    %52 = arith.addf %46, %51 : vector<8x256xf32>
    %53 = vector.extract_strided_slice %35 {offsets = [0, 3], sizes = [8, 1], strides = [1, 1]} : vector<8x4xf32> to vector<8x1xf32>
    %54 = vector.extract_strided_slice %34 {offsets = [3, 0], sizes = [1, 256], strides = [1, 1]} : vector<4x256xf32> to vector<1x256xf32>
    %55 = vector.broadcast %53 : vector<8x1xf32> to vector<8x256xf32>
    %56 = vector.broadcast %54 : vector<1x256xf32> to vector<8x256xf32>
    %57 = arith.mulf %55, %56 : vector<8x256xf32>
    %58 = arith.addf %52, %57 : vector<8x256xf32>
    %c0_i32_12 = arith.constant 0 : i32
    %59 = arith.cmpi eq, %arg0, %c0_i32_12 : i32
    %60 = arith.extui %59 : i1 to i32
    %c0_i32_13 = arith.constant 0 : i32
    %61 = arith.cmpi ne, %60, %c0_i32_13 : i32
    scf.if %61 {
      %c0_15 = arith.constant 0 : index
      %c0_16 = arith.constant 0 : index
      %65 = vector.load %arg12[%c0_15, %c0_16] : memref<8x1xf32, #tpu.memory_space<vmem>>, vector<8x1xf32>
      %cst = arith.constant dense<0.000000e+00> : vector<8xf32>
      %66 = vector.multi_reduction <add>, %32, %cst [1] : vector<8x256xf32> to vector<8xf32>
      %67 = vector.shape_cast %66 : vector<8xf32> to vector<8x1xf32>
      %68 = arith.addf %65, %67 : vector<8x1xf32>
      %c0_17 = arith.constant 0 : index
      %c0_18 = arith.constant 0 : index
      %69 = vector.load %arg12[%c0_17, %c0_18] : memref<8x1xf32, #tpu.memory_space<vmem>>, vector<8x1xf32>
      tpu.vector_store %arg12[%c0_17, %c0_18], %68 {strides = array<i32>} : memref<8x1xf32, #tpu.memory_space<vmem>>, vector<8x1xf32>,
      %c0_19 = arith.constant 0 : index
      %c0_20 = arith.constant 0 : index
      %70 = vector.load %arg13[%c0_19, %c0_20] : memref<8x1xf32, #tpu.memory_space<vmem>>, vector<8x1xf32>
      %71 = arith.mulf %32, %32 : vector<8x256xf32>
      %cst_21 = arith.constant dense<0.000000e+00> : vector<8xf32>
      %72 = vector.multi_reduction <add>, %71, %cst_21 [1] : vector<8x256xf32> to vector<8xf32>
      %73 = vector.shape_cast %72 : vector<8xf32> to vector<8x1xf32>
      %74 = arith.addf %70, %73 : vector<8x1xf32>
      %c0_22 = arith.constant 0 : index
      %c0_23 = arith.constant 0 : index
      %75 = vector.load %arg13[%c0_22, %c0_23] : memref<8x1xf32, #tpu.memory_space<vmem>>, vector<8x1xf32>
      tpu.vector_store %arg13[%c0_22, %c0_23], %74 {strides = array<i32>} : memref<8x1xf32, #tpu.memory_space<vmem>>, vector<8x1xf32>,
      %c0_24 = arith.constant 0 : index
      %c0_25 = arith.constant 0 : index
      %76 = vector.load %arg14[%c0_24, %c0_25] : memref<8x1xf32, #tpu.memory_space<vmem>>, vector<8x1xf32>
      %cst_26 = arith.constant dense<0.000000e+00> : vector<8xf32>
      %77 = vector.multi_reduction <add>, %58, %cst_26 [1] : vector<8x256xf32> to vector<8xf32>
      %78 = vector.shape_cast %77 : vector<8xf32> to vector<8x1xf32>
      %79 = arith.addf %76, %78 : vector<8x1xf32>
      %c0_27 = arith.constant 0 : index
      %c0_28 = arith.constant 0 : index
      %80 = vector.load %arg14[%c0_27, %c0_28] : memref<8x1xf32, #tpu.memory_space<vmem>>, vector<8x1xf32>
      tpu.vector_store %arg14[%c0_27, %c0_28], %79 {strides = array<i32>} : memref<8x1xf32, #tpu.memory_space<vmem>>, vector<8x1xf32>,
      %c0_29 = arith.constant 0 : index
      %c0_30 = arith.constant 0 : index
      %81 = vector.load %arg15[%c0_29, %c0_30] : memref<8x1xf32, #tpu.memory_space<vmem>>, vector<8x1xf32>
      %82 = arith.mulf %58, %58 : vector<8x256xf32>
      %cst_31 = arith.constant dense<0.000000e+00> : vector<8xf32>
      %83 = vector.multi_reduction <add>, %82, %cst_31 [1] : vector<8x256xf32> to vector<8xf32>
      %84 = vector.shape_cast %83 : vector<8xf32> to vector<8x1xf32>
      %85 = arith.addf %81, %84 : vector<8x1xf32>
      %c0_32 = arith.constant 0 : index
      %c0_33 = arith.constant 0 : index
      %86 = vector.load %arg15[%c0_32, %c0_33] : memref<8x1xf32, #tpu.memory_space<vmem>>, vector<8x1xf32>
      tpu.vector_store %arg15[%c0_32, %c0_33], %85 {strides = array<i32>} : memref<8x1xf32, #tpu.memory_space<vmem>>, vector<8x1xf32>,
    } else {
    }
    %c1_i32 = arith.constant 1 : i32
    %62 = arith.cmpi eq, %arg0, %c1_i32 : i32
    %63 = arith.extui %62 : i1 to i32
    %c0_i32_14 = arith.constant 0 : i32
    %64 = arith.cmpi ne, %63, %c0_i32_14 : i32
    scf.if %64 {
      %c0_15 = arith.constant 0 : index
      %c0_16 = arith.constant 0 : index
      %65 = vector.load %arg8[%c0_15, %c0_16] : memref<8x4xf32, #tpu.memory_space<vmem>>, vector<8x4xf32>
      %c0_17 = arith.constant 0 : index
      %c0_18 = arith.constant 0 : index
      %66 = vector.load %arg12[%c0_17, %c0_18] : memref<8x1xf32, #tpu.memory_space<vmem>>, vector<8x1xf32>
      %cst = arith.constant 0.001953125 : f32
      %67 = vector.broadcast %cst : f32 to vector<8x1xf32>
      %68 = arith.mulf %66, %67 : vector<8x1xf32>
      %c0_19 = arith.constant 0 : index
      %c0_20 = arith.constant 0 : index
      %69 = vector.load %arg13[%c0_19, %c0_20] : memref<8x1xf32, #tpu.memory_space<vmem>>, vector<8x1xf32>
      %cst_21 = arith.constant 0.001953125 : f32
      %70 = vector.broadcast %cst_21 : f32 to vector<8x1xf32>
      %71 = arith.mulf %69, %70 : vector<8x1xf32>
      %72 = arith.mulf %68, %68 : vector<8x1xf32>
      %73 = arith.subf %71, %72 : vector<8x1xf32>
      %74 = vector.extract_strided_slice %65 {offsets = [0, 0], sizes = [8, 1], strides = [1, 1]} : vector<8x4xf32> to vector<8x1xf32>
      %cst_22 = arith.constant 9.99999974E-6 : f32
      %75 = vector.broadcast %cst_22 : f32 to vector<8x1xf32>
      %76 = arith.addf %73, %75 : vector<8x1xf32>
      %77 = math.rsqrt %76 : vector<8x1xf32>
      %78 = arith.mulf %74, %77 : vector<8x1xf32>
      %79 = vector.extract_strided_slice %65 {offsets = [0, 1], sizes = [8, 1], strides = [1, 1]} : vector<8x4xf32> to vector<8x1xf32>
      %80 = arith.mulf %68, %78 : vector<8x1xf32>
      %81 = arith.subf %79, %80 : vector<8x1xf32>
      %c0_23 = arith.constant 0 : index
      %c0_24 = arith.constant 0 : index
      %82 = vector.load %arg14[%c0_23, %c0_24] : memref<8x1xf32, #tpu.memory_space<vmem>>, vector<8x1xf32>
      %cst_25 = arith.constant 0.001953125 : f32
      %83 = vector.broadcast %cst_25 : f32 to vector<8x1xf32>
      %84 = arith.mulf %82, %83 : vector<8x1xf32>
      %c0_26 = arith.constant 0 : index
      %c0_27 = arith.constant 0 : index
      %85 = vector.load %arg15[%c0_26, %c0_27] : memref<8x1xf32, #tpu.memory_space<vmem>>, vector<8x1xf32>
      %cst_28 = arith.constant 0.001953125 : f32
      %86 = vector.broadcast %cst_28 : f32 to vector<8x1xf32>
      %87 = arith.mulf %85, %86 : vector<8x1xf32>
      %88 = arith.mulf %84, %84 : vector<8x1xf32>
      %89 = arith.subf %87, %88 : vector<8x1xf32>
      %90 = vector.extract_strided_slice %65 {offsets = [0, 2], sizes = [8, 1], strides = [1, 1]} : vector<8x4xf32> to vector<8x1xf32>
      %cst_29 = arith.constant 9.99999974E-6 : f32
      %91 = vector.broadcast %cst_29 : f32 to vector<8x1xf32>
      %92 = arith.addf %89, %91 : vector<8x1xf32>
      %93 = math.rsqrt %92 : vector<8x1xf32>
      %94 = arith.mulf %90, %93 : vector<8x1xf32>
      %95 = vector.extract_strided_slice %65 {offsets = [0, 3], sizes = [8, 1], strides = [1, 1]} : vector<8x4xf32> to vector<8x1xf32>
      %96 = arith.mulf %84, %94 : vector<8x1xf32>
      %97 = arith.subf %95, %96 : vector<8x1xf32>
      %98 = vector.broadcast %78 : vector<8x1xf32> to vector<8x256xf32>
      %99 = arith.mulf %32, %98 : vector<8x256xf32>
      %100 = vector.broadcast %81 : vector<8x1xf32> to vector<8x256xf32>
      %101 = arith.addf %99, %100 : vector<8x256xf32>
      %102 = vector.broadcast %94 : vector<8x1xf32> to vector<8x256xf32>
      %103 = arith.mulf %58, %102 : vector<8x256xf32>
      %104 = arith.addf %101, %103 : vector<8x256xf32>
      %105 = vector.broadcast %97 : vector<8x1xf32> to vector<8x256xf32>
      %106 = arith.addf %104, %105 : vector<8x256xf32>
      %cst_30 = arith.constant 0.000000e+00 : f32
      %107 = vector.broadcast %cst_30 : f32 to vector<8x256xf32>
      %108 = arith.maximumf %106, %107 : vector<8x256xf32>
      %c0_31 = arith.constant 0 : index
      %c0_32 = arith.constant 0 : index
      %109 = vector.load %arg7[%c0_31, %c0_32] : memref<8x1xf32, #tpu.memory_space<vmem>>, vector<8x1xf32>
      %110 = vector.broadcast %109 : vector<8x1xf32> to vector<8x256xf32>
      %111 = arith.mulf %108, %110 : vector<8x256xf32>
      %cst_33 = arith.constant dense<0.000000e+00> : vector<256xf32>
      %112 = vector.multi_reduction <add>, %111, %cst_33 [0] : vector<8x256xf32> to vector<256xf32>
      %113 = vector.shape_cast %112 : vector<256xf32> to vector<1x256xf32>
      %c0_34 = arith.constant 0 : index
      %c0_35 = arith.constant 0 : index
      %114 = vector.load %arg16[%c0_34, %c0_35] : memref<1x1xf32, #tpu.memory_space<vmem>>, vector<1x1xf32>
      %cst_36 = arith.constant dense<0.000000e+00> : vector<1xf32>
      %115 = vector.multi_reduction <add>, %113, %cst_36 [1] : vector<1x256xf32> to vector<1xf32>
      %116 = vector.shape_cast %115 : vector<1xf32> to vector<1x1xf32>
      %117 = arith.addf %114, %116 : vector<1x1xf32>
      %c0_37 = arith.constant 0 : index
      %c0_38 = arith.constant 0 : index
      %118 = vector.load %arg16[%c0_37, %c0_38] : memref<1x1xf32, #tpu.memory_space<vmem>>, vector<1x1xf32>
      tpu.vector_store %arg16[%c0_37, %c0_38], %117 {strides = array<i32>} : memref<1x1xf32, #tpu.memory_space<vmem>>, vector<1x1xf32>,
      %c0_39 = arith.constant 0 : index
      %c0_40 = arith.constant 0 : index
      %119 = vector.load %arg17[%c0_39, %c0_40] : memref<1x1xf32, #tpu.memory_space<vmem>>, vector<1x1xf32>
      %120 = arith.mulf %113, %113 : vector<1x256xf32>
      %cst_41 = arith.constant dense<0.000000e+00> : vector<1xf32>
      %121 = vector.multi_reduction <add>, %120, %cst_41 [1] : vector<1x256xf32> to vector<1xf32>
      %122 = vector.shape_cast %121 : vector<1xf32> to vector<1x1xf32>
      %123 = arith.addf %119, %122 : vector<1x1xf32>
      %c0_42 = arith.constant 0 : index
      %c0_43 = arith.constant 0 : index
      %124 = vector.load %arg17[%c0_42, %c0_43] : memref<1x1xf32, #tpu.memory_space<vmem>>, vector<1x1xf32>
      tpu.vector_store %arg17[%c0_42, %c0_43], %123 {strides = array<i32>} : memref<1x1xf32, #tpu.memory_space<vmem>>, vector<1x1xf32>,
      %c1_i32_44 = arith.constant 1 : i32
      %125 = arith.cmpi eq, %arg1, %c1_i32_44 : i32
      %c0_i32_45 = arith.constant 0 : i32
      %126 = arith.cmpi eq, %arg2, %c0_i32_45 : i32
      %127 = arith.andi %125, %126 : i1
      %128 = arith.extui %127 : i1 to i32
      %c0_i32_46 = arith.constant 0 : i32
      %129 = arith.cmpi ne, %128, %c0_i32_46 : i32
      scf.if %129 {
        %c0_47 = arith.constant 0 : index
        %c0_48 = arith.constant 0 : index
        %130 = vector.load %arg9[%c0_47, %c0_48] : memref<1x2xf32, #tpu.memory_space<vmem>>, vector<1x2xf32>
        %c0_49 = arith.constant 0 : index
        %c0_50 = arith.constant 0 : index
        %131 = vector.load %arg16[%c0_49, %c0_50] : memref<1x1xf32, #tpu.memory_space<vmem>>, vector<1x1xf32>
        %cst_51 = arith.constant 0.001953125 : f32
        %132 = vector.broadcast %cst_51 : f32 to vector<1x1xf32>
        %133 = arith.mulf %131, %132 : vector<1x1xf32>
        %c0_52 = arith.constant 0 : index
        %c0_53 = arith.constant 0 : index
        %134 = vector.load %arg17[%c0_52, %c0_53] : memref<1x1xf32, #tpu.memory_space<vmem>>, vector<1x1xf32>
        %cst_54 = arith.constant 0.001953125 : f32
        %135 = vector.broadcast %cst_54 : f32 to vector<1x1xf32>
        %136 = arith.mulf %134, %135 : vector<1x1xf32>
        %137 = arith.mulf %133, %133 : vector<1x1xf32>
        %138 = arith.subf %136, %137 : vector<1x1xf32>
        %139 = vector.extract_strided_slice %130 {offsets = [0, 0], sizes = [1, 1], strides = [1, 1]} : vector<1x2xf32> to vector<1x1xf32>
        %cst_55 = arith.constant 9.99999974E-6 : f32
        %140 = vector.broadcast %cst_55 : f32 to vector<1x1xf32>
        %141 = arith.addf %138, %140 : vector<1x1xf32>
        %142 = math.rsqrt %141 : vector<1x1xf32>
        %143 = arith.mulf %139, %142 : vector<1x1xf32>
        %144 = vector.extract_strided_slice %130 {offsets = [0, 1], sizes = [1, 1], strides = [1, 1]} : vector<1x2xf32> to vector<1x1xf32>
        %145 = arith.mulf %133, %143 : vector<1x1xf32>
        %146 = arith.subf %144, %145 : vector<1x1xf32>
        %c0_56 = arith.constant 0 : index
        %c0_57 = arith.constant 0 : index
        %147 = vector.load %arg10[%c0_56, %c0_57] : memref<8x4xf32, #tpu.memory_space<vmem>>, vector<8x1xf32>
        tpu.vector_store %arg10[%c0_56, %c0_57], %78 {strides = array<i32>} : memref<8x4xf32, #tpu.memory_space<vmem>>, vector<8x1xf32>,
        %c0_58 = arith.constant 0 : index
        %c1 = arith.constant 1 : index
        %148 = vector.load %arg10[%c0_58, %c1] : memref<8x4xf32, #tpu.memory_space<vmem>>, vector<8x1xf32>
        tpu.vector_store %arg10[%c0_58, %c1], %81 {strides = array<i32>} : memref<8x4xf32, #tpu.memory_space<vmem>>, vector<8x1xf32>,
        %c0_59 = arith.constant 0 : index
        %c2 = arith.constant 2 : index
        %149 = vector.load %arg10[%c0_59, %c2] : memref<8x4xf32, #tpu.memory_space<vmem>>, vector<8x1xf32>
        tpu.vector_store %arg10[%c0_59, %c2], %94 {strides = array<i32>} : memref<8x4xf32, #tpu.memory_space<vmem>>, vector<8x1xf32>,
        %c0_60 = arith.constant 0 : index
        %c3 = arith.constant 3 : index
        %150 = vector.load %arg10[%c0_60, %c3] : memref<8x4xf32, #tpu.memory_space<vmem>>, vector<8x1xf32>
        tpu.vector_store %arg10[%c0_60, %c3], %97 {strides = array<i32>} : memref<8x4xf32, #tpu.memory_space<vmem>>, vector<8x1xf32>,
        %c0_61 = arith.constant 0 : index
        %c0_62 = arith.constant 0 : index
        %151 = vector.load %arg11[%c0_61, %c0_62] : memref<1x2xf32, #tpu.memory_space<vmem>>, vector<1x1xf32>
        tpu.vector_store %arg11[%c0_61, %c0_62], %143 {strides = array<i32>} : memref<1x2xf32, #tpu.memory_space<vmem>>, vector<1x1xf32>,
        %c0_63 = arith.constant 0 : index
        %c1_64 = arith.constant 1 : index
        %152 = vector.load %arg11[%c0_63, %c1_64] : memref<1x2xf32, #tpu.memory_space<vmem>>, vector<1x1xf32>
        tpu.vector_store %arg11[%c0_63, %c1_64], %146 {strides = array<i32>} : memref<1x2xf32, #tpu.memory_space<vmem>>, vector<1x1xf32>,
      } else {
      }
    } else {
    }
    return
  }
  func.func @transform_0(%arg0: i32, %arg1: i32, %arg2: i32) -> (i32, i32, i32) {
    %c0_i32 = arith.constant 0 : i32
    %c0_i32_0 = arith.constant 0 : i32
    return %arg1, %c0_i32, %arg2 : i32, i32, i32
  }
  func.func @transform_1(%arg0: i32, %arg1: i32, %arg2: i32) -> (i32, i32, i32) {
    %c0_i32 = arith.constant 0 : i32
    %c0_i32_0 = arith.constant 0 : i32
    return %arg1, %c0_i32, %arg2 : i32, i32, i32
  }
  func.func @transform_2(%arg0: i32, %arg1: i32, %arg2: i32) -> (i32, i32) {
    %c0_i32 = arith.constant 0 : i32
    %c0_i32_0 = arith.constant 0 : i32
    %c0_i32_1 = arith.constant 0 : i32
    return %c0_i32, %c0_i32_0 : i32, i32
  }
  func.func @transform_3(%arg0: i32, %arg1: i32, %arg2: i32) -> (i32, i32) {
    %c0_i32 = arith.constant 0 : i32
    %c0_i32_0 = arith.constant 0 : i32
    %c0_i32_1 = arith.constant 0 : i32
    return %c0_i32, %c0_i32_0 : i32, i32
  }
  func.func @transform_4(%arg0: i32, %arg1: i32, %arg2: i32) -> (i32, i32) {
    %c0_i32 = arith.constant 0 : i32
    %c0_i32_0 = arith.constant 0 : i32
    %c0_i32_1 = arith.constant 0 : i32
    return %c0_i32, %c0_i32_0 : i32, i32
  }
  func.func @transform_5(%arg0: i32, %arg1: i32, %arg2: i32) -> (i32, i32) {
    %c0_i32 = arith.constant 0 : i32
    %c0_i32_0 = arith.constant 0 : i32
    %c0_i32_1 = arith.constant 0 : i32
    return %c0_i32, %c0_i32_0 : i32, i32
  }
  func.func @transform_6(%arg0: i32, %arg1: i32, %arg2: i32) -> (i32, i32) {
    %c0_i32 = arith.constant 0 : i32
    %c0_i32_0 = arith.constant 0 : i32
    %c0_i32_1 = arith.constant 0 : i32
    return %c0_i32, %c0_i32_0 : i32, i32
  }
  func.func @transform_7(%arg0: i32, %arg1: i32, %arg2: i32) -> (i32, i32) {
    %c0_i32 = arith.constant 0 : i32
    %c0_i32_0 = arith.constant 0 : i32
    %c0_i32_1 = arith.constant 0 : i32
    return %c0_i32, %c0_i32_0 : i32, i32
  }
  func.func @transform_8(%arg0: i32, %arg1: i32, %arg2: i32) -> (i32, i32) {
    %c0_i32 = arith.constant 0 : i32
    %c0_i32_0 = arith.constant 0 : i32
    %c0_i32_1 = arith.constant 0 : i32
    return %c0_i32, %c0_i32_0 : i32, i32
  }
}

</mosaic_0001>

<llo_original>
// kernel: tpu_custom_call.1
$region0: #{tpu_custom_call.1}
  #allocation0 [shape = 'u32[]', space=smem, size = 0x4, offset = 0x4, fixed_abs, tag = 'smem constant byte address 0x4 - core index']
  #allocation1 [shape = 'u32[72,128]{1,0:T(1,128)}', space=vmem, size = 0x9000, scoped, tag = 'internal scratch']
  #allocation2 [shape = 'f32[8,1]{1,0:T(8,128)}', space=vmem, size = 0x1000, scoped, tag = 'scratch operand']
  #allocation3 [shape = 'f32[8,1]{1,0:T(8,128)}', space=vmem, size = 0x1000, scoped, tag = 'scratch operand']
  #allocation4 [shape = 'f32[8,1]{1,0:T(8,128)}', space=vmem, size = 0x1000, scoped, tag = 'scratch operand']
  #allocation5 [shape = 'f32[8,1]{1,0:T(8,128)}', space=vmem, size = 0x1000, scoped, tag = 'scratch operand']
  #allocation6 [shape = 'f32[1,1]{1,0:T(1,128)}', space=vmem, size = 0x200, scoped, tag = 'scratch operand']
  #allocation7 [shape = 'f32[1,1]{1,0:T(1,128)}', space=vmem, size = 0x200, scoped, tag = 'scratch operand']
  %s0 = inlined_call_operand.vmem [shape: f32[2,4,256], index: 0, kind: input, shape index: {}]
  %s1 = inlined_call_operand.vmem [shape: f32[2,4,256], index: 1, kind: input, shape index: {}]
  %s2 = inlined_call_operand.vmem [shape: f32[8,4], index: 2, kind: input, shape index: {}]
  %s3 = inlined_call_operand.vmem [shape: f32[8,4], index: 3, kind: input, shape index: {}]
  %s4 = inlined_call_operand.vmem [shape: f32[8,1], index: 4, kind: input, shape index: {}]
  %s5 = inlined_call_operand.vmem [shape: f32[8,4], index: 5, kind: input, shape index: {}]
  %s6 = inlined_call_operand.vmem [shape: f32[1,2], index: 6, kind: input, shape index: {}]
  %s7 = inlined_call_operand.vmem [shape: f32[8,4], index: 7, kind: output, shape index: {0}]
  %s8 = inlined_call_operand.hbm [shape: f32[1,2], index: 8, kind: output, shape index: {1}]
  %9 = xla_tuple %s7, %s8
  %s10 = sld [smem:[#allocation0]]
  $region85: #{tpu_custom_call.1} parent=0
    _
  %s12 = ssub.s32 1, %s10
  %s13 = scalar_select 0, %s12, %s10
  $region1: #{tpu_custom_call.1} parent=0
    #allocation8 [shape = 'u8[512]{0}', space=vmem, size = 0x400, scoped, tag = 'output window, operand 1, single buffered']
    #allocation9 [shape = 's32[2]{0}', space=sflag, size = 0x8, scoped, tag = 'scoped memory for tpu_custom_call.1']
    %14 = vsyncpa [#allocation9], 0
    loop: start=0, step=1, limit=6
    $region2: #{tpu_custom_call.1} parent=1 // loop_pre_header
      _
    $region3: #{tpu_custom_call.1} parent=1 // loop_header
      %s16 = sphi 0, %s20
      %p17 = scmp.ge.s32.totalorder %s16, 6
      %s23 = sphi 0, %s42
      %s24 = sphi 0, %s38
      %s25 = sphi 0, %s34
      %s26 = sphi 0, %s23
      %s27 = sphi 0, %s24
      %s28 = sphi 0, %s25
      %s29 = sphi 0, %s26
      %s30 = sphi 0, %s27
      %s31 = sphi 0, %s28
      %s47 = sphi 0, %s49
      %s50 = sphi 0, %s47
      %s51 = sphi 0, %s50
      %s67 = sphi 0, %s51
      %s75 = sphi 0, %s77
      %s78 = sphi 0, %s75
      %s79 = sphi 0, %s78
      %s95 = sphi 0, %s79
      %s99 = sphi 0, %s99
      %s101 = sphi 0, %s99
      %s102 = sphi 0, %s101
      %s116 = sphi 0, %s102
      %s120 = sphi 0, %s120
      %s122 = sphi 0, %s120
      %s123 = sphi 0, %s122
      %s137 = sphi 0, %s123
      %s141 = sphi 0, %s141
      %s143 = sphi 0, %s141
      %s144 = sphi 0, %s143
      %s158 = sphi 0, %s144
      %s162 = sphi 0, %s162
      %s164 = sphi 0, %s162
      %s165 = sphi 0, %s164
      %s179 = sphi 0, %s165
      %s183 = sphi 0, %s183
      %s185 = sphi 0, %s183
      %s186 = sphi 0, %s185
      %s200 = sphi 0, %s186
      %s204 = sphi 0, %s204
      %s206 = sphi 0, %s204
      %s207 = sphi 0, %s206
      %s221 = sphi 0, %s207
      %s225 = sphi 0, %s225
      %s227 = sphi 0, %s225
      %s228 = sphi 0, %s227
      %s242 = sphi 0, %s228
    $region4: #{tpu_custom_call.1} parent=1 // loop_header_branch
      %19 = sbr.rel (%p17) target = $region8
    $region5: #{tpu_custom_call.1} parent=1 // loop_body
      %s21 = ssub.s32 %s16, 1
      %s22 = ssub.s32 %s16, 2
      %s32 = sadd.s32 1, %s25
      %p33 = scmp.ge.s32.totalorder %s32, 1
      %s34 = scalar_select %p33, 0, %s32
      %s35 = sadd.s32 1, %s24
      %s36 = scalar_select %p33, %s35, %s24
      %p37 = scmp.ge.s32.totalorder %s36, 2
      %s38 = scalar_select %p37, 0, %s36
      %s39 = sadd.s32 1, %s23
      %s40 = scalar_select %p37, %s39, %s23
      %p41 = scmp.ge.s32.totalorder %s40, 2
      %s42 = scalar_select %p41, 0, %s40
      %s43 = ssub.s32 %s24, %s38
      %s44 = ssub.s32 %s25, %s34
      %s45 = sor.u32 %s43, %s44
      %p46 = scmp.eq.s32.totalorder %s45, 0
      %s48 = sadd.s32 %s47, 1
      %s49 = scalar_select %p46, %s47, %s48
      %p52 = pneg %p46
      %p53 = scmp.eq.s32.totalorder %s16, 3
      %p54 = por %p52, %p53
      %p55 = scmp.ne.s32.totalorder %s47, %s50
      %p56 = scmp.eq.s32.totalorder %s16, 0
      %p57 = por %p55, %p56
      %p58 = scmp.ne.s32.totalorder %s47, %s50
      %p59 = scmp.eq.s32.totalorder %s21, 3
      %p60 = por %p58, %p59
      %p61 = scmp.ne.s32.totalorder %s50, %s51
      %p62 = scmp.eq.s32.totalorder %s21, 0
      %p63 = por %p61, %p62
      %p64 = scmp.ne.s32.totalorder %s50, %s51
      %p65 = scmp.eq.s32.totalorder %s22, 3
      %p66 = por %p64, %p65
      %p68 = scmp.ne.s32.totalorder %s51, %s67
      %p69 = scmp.eq.s32.totalorder %s22, 0
      %p70 = por %p68, %p69
      %s71 = ssub.s32 %s24, %s38
      %s72 = ssub.s32 %s25, %s34
      %s73 = sor.u32 %s71, %s72
      %p74 = scmp.eq.s32.totalorder %s73, 0
      %s76 = sadd.s32 %s75, 1
      %s77 = scalar_select %p74, %s75, %s76
      %p80 = pneg %p74
      %p81 = scmp.eq.s32.totalorder %s16, 3
      %p82 = por %p80, %p81
      %p83 = scmp.ne.s32.totalorder %s75, %s78
      %p84 = scmp.eq.s32.totalorder %s16, 0
      %p85 = por %p83, %p84
      %p86 = scmp.ne.s32.totalorder %s75, %s78
      %p87 = scmp.eq.s32.totalorder %s21, 3
      %p88 = por %p86, %p87
      %p89 = scmp.ne.s32.totalorder %s78, %s79
      %p90 = scmp.eq.s32.totalorder %s21, 0
      %p91 = por %p89, %p90
      %p92 = scmp.ne.s32.totalorder %s78, %s79
      %p93 = scmp.eq.s32.totalorder %s22, 3
      %p94 = por %p92, %p93
      %p96 = scmp.ne.s32.totalorder %s79, %s95
      %p97 = scmp.eq.s32.totalorder %s22, 0
      %p98 = por %p96, %p97
      %s100 = sadd.s32 %s99, 1
      %p103 = scmp.eq.s32.totalorder %s16, 3
      %p104 = scmp.ne.s32.totalorder %s99, %s101
      %p105 = scmp.eq.s32.totalorder %s16, 0
      %p106 = por %p104, %p105
      %p107 = scmp.ne.s32.totalorder %s99, %s101
      %p108 = scmp.eq.s32.totalorder %s21, 3
      %p109 = por %p107, %p108
      %p110 = scmp.ne.s32.totalorder %s101, %s102
      %p111 = scmp.eq.s32.totalorder %s21, 0
      %p112 = por %p110, %p111
      %p113 = scmp.ne.s32.totalorder %s101, %s102
      %p114 = scmp.eq.s32.totalorder %s22, 3
      %p115 = por %p113, %p114
      %p117 = scmp.ne.s32.totalorder %s102, %s116
      %p118 = scmp.eq.s32.totalorder %s22, 0
      %p119 = por %p117, %p118
      %s121 = sadd.s32 %s120, 1
      %p124 = scmp.eq.s32.totalorder %s16, 3
      %p125 = scmp.ne.s32.totalorder %s120, %s122
      %p126 = scmp.eq.s32.totalorder %s16, 0
      %p127 = por %p125, %p126
      %p128 = scmp.ne.s32.totalorder %s120, %s122
      %p129 = scmp.eq.s32.totalorder %s21, 3
      %p130 = por %p128, %p129
      %p131 = scmp.ne.s32.totalorder %s122, %s123
      %p132 = scmp.eq.s32.totalorder %s21, 0
      %p133 = por %p131, %p132
      %p134 = scmp.ne.s32.totalorder %s122, %s123
      %p135 = scmp.eq.s32.totalorder %s22, 3
      %p136 = por %p134, %p135
      %p138 = scmp.ne.s32.totalorder %s123, %s137
      %p139 = scmp.eq.s32.totalorder %s22, 0
      %p140 = por %p138, %p139
      %s142 = sadd.s32 %s141, 1
      %p145 = scmp.eq.s32.totalorder %s16, 3
      %p146 = scmp.ne.s32.totalorder %s141, %s143
      %p147 = scmp.eq.s32.totalorder %s16, 0
      %p148 = por %p146, %p147
      %p149 = scmp.ne.s32.totalorder %s141, %s143
      %p150 = scmp.eq.s32.totalorder %s21, 3
      %p151 = por %p149, %p150
      %p152 = scmp.ne.s32.totalorder %s143, %s144
      %p153 = scmp.eq.s32.totalorder %s21, 0
      %p154 = por %p152, %p153
      %p155 = scmp.ne.s32.totalorder %s143, %s144
      %p156 = scmp.eq.s32.totalorder %s22, 3
      %p157 = por %p155, %p156
      %p159 = scmp.ne.s32.totalorder %s144, %s158
      %p160 = scmp.eq.s32.totalorder %s22, 0
      %p161 = por %p159, %p160
      %s163 = sadd.s32 %s162, 1
      %p166 = scmp.eq.s32.totalorder %s16, 3
      %p167 = scmp.ne.s32.totalorder %s162, %s164
      %p168 = scmp.eq.s32.totalorder %s16, 0
      %p169 = por %p167, %p168
      %p170 = scmp.ne.s32.totalorder %s162, %s164
      %p171 = scmp.eq.s32.totalorder %s21, 3
      %p172 = por %p170, %p171
      %p173 = scmp.ne.s32.totalorder %s164, %s165
      %p174 = scmp.eq.s32.totalorder %s21, 0
      %p175 = por %p173, %p174
      %p176 = scmp.ne.s32.totalorder %s164, %s165
      %p177 = scmp.eq.s32.totalorder %s22, 3
      %p178 = por %p176, %p177
      %p180 = scmp.ne.s32.totalorder %s165, %s179
      %p181 = scmp.eq.s32.totalorder %s22, 0
      %p182 = por %p180, %p181
      %s184 = sadd.s32 %s183, 1
      %p187 = scmp.eq.s32.totalorder %s16, 3
      %p188 = scmp.ne.s32.totalorder %s183, %s185
      %p189 = scmp.eq.s32.totalorder %s16, 0
      %p190 = por %p188, %p189
      %p191 = scmp.ne.s32.totalorder %s183, %s185
      %p192 = scmp.eq.s32.totalorder %s21, 3
      %p193 = por %p191, %p192
      %p194 = scmp.ne.s32.totalorder %s185, %s186
      %p195 = scmp.eq.s32.totalorder %s21, 0
      %p196 = por %p194, %p195
      %p197 = scmp.ne.s32.totalorder %s185, %s186
      %p198 = scmp.eq.s32.totalorder %s22, 3
      %p199 = por %p197, %p198
      %p201 = scmp.ne.s32.totalorder %s186, %s200
      %p202 = scmp.eq.s32.totalorder %s22, 0
      %p203 = por %p201, %p202
      %s205 = sadd.s32 %s204, 1
      %p208 = scmp.eq.s32.totalorder %s16, 3
      %p209 = scmp.ne.s32.totalorder %s204, %s206
      %p210 = scmp.eq.s32.totalorder %s16, 0
      %p211 = por %p209, %p210
      %p212 = scmp.ne.s32.totalorder %s204, %s206
      %p213 = scmp.eq.s32.totalorder %s21, 3
      %p214 = por %p212, %p213
      %p215 = scmp.ne.s32.totalorder %s206, %s207
      %p216 = scmp.eq.s32.totalorder %s21, 0
      %p217 = por %p215, %p216
      %p218 = scmp.ne.s32.totalorder %s206, %s207
      %p219 = scmp.eq.s32.totalorder %s22, 3
      %p220 = por %p218, %p219
      %p222 = scmp.ne.s32.totalorder %s207, %s221
      %p223 = scmp.eq.s32.totalorder %s22, 0
      %p224 = por %p222, %p223
      %s226 = sadd.s32 %s225, 1
      %p229 = scmp.eq.s32.totalorder %s16, 3
      %p230 = scmp.ne.s32.totalorder %s225, %s227
      %p231 = scmp.eq.s32.totalorder %s16, 0
      %p232 = por %p230, %p231
      %p233 = scmp.ne.s32.totalorder %s225, %s227
      %p234 = scmp.eq.s32.totalorder %s21, 3
      %p235 = por %p233, %p234
      %p236 = scmp.ne.s32.totalorder %s227, %s228
      %p237 = scmp.eq.s32.totalorder %s21, 0
      %p238 = por %p236, %p237
      %p239 = scmp.ne.s32.totalorder %s227, %s228
      %p240 = scmp.eq.s32.totalorder %s22, 3
      %p241 = por %p239, %p240
      %p243 = scmp.ne.s32.totalorder %s228, %s242
      %p244 = scmp.eq.s32.totalorder %s22, 0
      %p245 = por %p243, %p244
      %p246 = scmp.le.s32.totalorder 1, %s16
      %p247 = scmp.lt.s32.totalorder %s16, 5
      %p248 = pnand %p246, %p247
      %p249 = pneg %p248
      // Predicated region
      $region9: #{tpu_custom_call.1} parent=5 // pred_check
        _
      $region10: #{tpu_custom_call.1} parent=5 // pred_check_branch
        %251 = sbr.rel (%p248) target = $region12
      $region11: #{tpu_custom_call.1} parent=5 // pred_region
        %s252 = ssub.s32 %s16, 1
        // Predicated region
        $region13: #{tpu_custom_call.1} parent=11 // pred_check
          %p253 = pneg %p112
        $region14: #{tpu_custom_call.1} parent=11 // pred_check_branch
          %255 = sbr.rel (%p253) target = $region16
        $region15: #{tpu_custom_call.1} parent=11 // pred_region
          _
        $region16: #{tpu_custom_call.1} parent=11 // pred_fallthru
          _
        // Predicated region
        $region17: #{tpu_custom_call.1} parent=11 // pred_check
          %p256 = pneg %p133
        $region18: #{tpu_custom_call.1} parent=11 // pred_check_branch
          %258 = sbr.rel (%p256) target = $region20
        $region19: #{tpu_custom_call.1} parent=11 // pred_region
          _
        $region20: #{tpu_custom_call.1} parent=11 // pred_fallthru
          _
        // Predicated region
        $region21: #{tpu_custom_call.1} parent=11 // pred_check
          %p259 = pneg %p154
        $region22: #{tpu_custom_call.1} parent=11 // pred_check_branch
          %261 = sbr.rel (%p259) target = $region24
        $region23: #{tpu_custom_call.1} parent=11 // pred_region
          _
        $region24: #{tpu_custom_call.1} parent=11 // pred_fallthru
          _
        // Predicated region
        $region25: #{tpu_custom_call.1} parent=11 // pred_check
          %p262 = pneg %p175
        $region26: #{tpu_custom_call.1} parent=11 // pred_check_branch
          %264 = sbr.rel (%p262) target = $region28
        $region27: #{tpu_custom_call.1} parent=11 // pred_region
          _
        $region28: #{tpu_custom_call.1} parent=11 // pred_fallthru
          _
        // Predicated region
        $region29: #{tpu_custom_call.1} parent=11 // pred_check
          %p265 = pneg %p196
        $region30: #{tpu_custom_call.1} parent=11 // pred_check_branch
          %267 = sbr.rel (%p265) target = $region32
        $region31: #{tpu_custom_call.1} parent=11 // pred_region
          _
        $region32: #{tpu_custom_call.1} parent=11 // pred_fallthru
          _
      $region12: #{tpu_custom_call.1} parent=5 // pred_fallthru
        _
      %p268 = scmp.lt.s32.totalorder %s16, 4
      // Predicated region
      $region33: #{tpu_custom_call.1} parent=5 // pred_check
        %p269 = pneg %p268
      $region34: #{tpu_custom_call.1} parent=5 // pred_check_branch
        %271 = sbr.rel (%p269) target = $region36
      $region35: #{tpu_custom_call.1} parent=5 // pred_region
        // Predicated region
        $region37: #{tpu_custom_call.1} parent=35 // pred_check
          %p272 = pneg %p57
        $region38: #{tpu_custom_call.1} parent=35 // pred_check_branch
          %274 = sbr.rel (%p272) target = $region40
        $region39: #{tpu_custom_call.1} parent=35 // pred_region
          %s275 = smul.u32 2, %s25
          %p276 = scmp.lt.s32.totalorder %s24, 1
          %s277 = scalar_select %p276, %s24, 1
          %p278 = scmp.lt.s32.totalorder %s275, 1
          %s279 = scalar_select %p278, %s275, 1
          %s280 = smul.addr %s277, 2
          %s281 = sadd.s32 %s279, %s280
          %s282 = smul.addr %s281, 4
          %s283 = scalar_lea.vmem %s0, %s282
          %s284 = smul.u32 2, %s25
        $region40: #{tpu_custom_call.1} parent=35 // pred_fallthru
          _
        // Predicated region
        $region41: #{tpu_custom_call.1} parent=35 // pred_check
          %p285 = pneg %p85
        $region42: #{tpu_custom_call.1} parent=35 // pred_check_branch
          %287 = sbr.rel (%p285) target = $region44
        $region43: #{tpu_custom_call.1} parent=35 // pred_region
          %s288 = smul.u32 2, %s25
          %p289 = scmp.lt.s32.totalorder %s24, 1
          %s290 = scalar_select %p289, %s24, 1
          %p291 = scmp.lt.s32.totalorder %s288, 1
          %s292 = scalar_select %p291, %s288, 1
          %s293 = smul.addr %s290, 2
          %s294 = sadd.s32 %s292, %s293
          %s295 = smul.addr %s294, 4
          %s296 = scalar_lea.vmem %s1, %s295
          %s297 = smul.u32 2, %s25
        $region44: #{tpu_custom_call.1} parent=35 // pred_fallthru
          _
      $region36: #{tpu_custom_call.1} parent=5 // pred_fallthru
        _
      %p298 = scmp.le.s32.totalorder 1, %s16
      %p299 = scmp.lt.s32.totalorder %s16, 5
      %p300 = pnand %p298, %p299
      %p301 = pneg %p300
      // Predicated region
      $region45: #{tpu_custom_call.1} parent=5 // pred_check
        _
      $region46: #{tpu_custom_call.1} parent=5 // pred_check_branch
        %303 = sbr.rel (%p300) target = $region48
      $region47: #{tpu_custom_call.1} parent=5 // pred_region
        %s304 = ssub.s32 %s16, 1
        %s305 = smul.u32 2, %s28
        %p306 = scmp.lt.s32.totalorder %s27, 1
        %s307 = scalar_select %p306, %s27, 1
        %p308 = scmp.lt.s32.totalorder %s305, 1
        %s309 = scalar_select %p308, %s305, 1
        %s310 = smul.addr %s307, 2
        %s311 = sadd.s32 %s309, %s310
        %s312 = smul.addr %s311, 4
        %s313 = scalar_lea.vmem %s0, %s312
        %p314 = pneg %p63
        %p315 = pneg %p60
        %s316 = smul.u32 2, %s28
        %p317 = scmp.lt.s32.totalorder %s27, 1
        %s318 = scalar_select %p317, %s27, 1
        %p319 = scmp.lt.s32.totalorder %s316, 1
        %s320 = scalar_select %p319, %s316, 1
        %s321 = smul.addr %s318, 2
        %s322 = sadd.s32 %s320, %s321
        %s323 = smul.addr %s322, 4
        %s324 = scalar_lea.vmem %s1, %s323
        %p325 = pneg %p91
        %p326 = pneg %p88
        %p327 = pneg %p112
        %p328 = pneg %p109
        %p329 = pneg %p133
        %p330 = pneg %p130
        %p331 = pneg %p154
        %p332 = pneg %p151
        %p333 = pneg %p175
        %p334 = pneg %p172
        %p335 = pneg %p196
        %p336 = pneg %p193
        %p337 = pneg %p217
        %p338 = pneg %p214
        %p339 = pneg %p238
        %p340 = pneg %p235
        %s341 = smul.u32 2, %s28
        %p342 = scmp.lt.s32.totalorder %s27, 1
        %s343 = scalar_select %p342, %s27, 1
        %p344 = scmp.lt.s32.totalorder %s341, 1
        %s345 = scalar_select %p344, %s341, 1
        %s346 = smul.addr %s343, 2
        %s347 = sadd.s32 %s345, %s346
        %s348 = smul.addr %s347, 4
        %s349 = scalar_lea.vmem %s0, %s348
        %s350 = smul.u32 2, %s28
        %s351 = smul.u32 2, %s28
        %p352 = scmp.lt.s32.totalorder %s27, 1
        %s353 = scalar_select %p352, %s27, 1
        %p354 = scmp.lt.s32.totalorder %s351, 1
        %s355 = scalar_select %p354, %s351, 1
        %s356 = smul.addr %s353, 2
        %s357 = sadd.s32 %s355, %s356
        %s358 = smul.addr %s357, 4
        %s359 = scalar_lea.vmem %s1, %s358
        %s360 = smul.u32 2, %s28
        %p361 = scmp.eq.s32.totalorder %s26, 0
        %p362 = scmp.eq.s32.totalorder %s27, 0
        %p363 = pnand %p361, %p362
        %p364 = pneg %p363
        %p365 = scmp.eq.s32.totalorder %s28, 0
        %p366 = pnand %p364, %p365
        %p367 = pneg %p366
        // Predicated region
        $region49: #{tpu_custom_call.1} parent=47 // pred_check
          _
        $region50: #{tpu_custom_call.1} parent=47 // pred_check_branch
          %369 = sbr.rel (%p366) target = $region52
        $region51: #{tpu_custom_call.1} parent=47 // pred_region
          %vm370 = vcmask 7168
          %371 = vst.msk [vmem:[#allocation2] sm:$0xff] %vm370, 0.0
          %372 = vst.msk [vmem:[#allocation3] sm:$0xff] %vm370, 0.0
          %373 = vst.msk [vmem:[#allocation4] sm:$0xff] %vm370, 0.0
          %374 = vst.msk [vmem:[#allocation5] sm:$0xff] %vm370, 0.0
          %vm375 = vcmask 0
          %376 = vst.msk [vmem:[#allocation6] sm:$0x1] %vm375, 0.0
          %377 = vst.msk [vmem:[#allocation7] sm:$0x1] %vm375, 0.0
        $region52: #{tpu_custom_call.1} parent=47 // pred_fallthru
          _
        %v378 = vld [vmem:[%s349] sm:$0xff]
        %v379 = vld [vmem:[%s2] sm:$0xff]
        %381 = vset.pattern.permute.xlu0 0
        %382 = vperm.xlu0 %381, %v379
        %v383 = vpop.permute.xlu0 %382
        %v386 = vperm.slane %v378, 0
        %v387 = vperm.slane %v378, 4
        %v390 = vperm.slane %v386, 0
        %v391 = vperm.slane %v387, 0
        %v392 = vmul.f32 %v383, %v390
        %v393 = vmul.f32 %v383, %v391
        %394 = vset.pattern.permute.xlu0 1
        %395 = vperm.xlu0 %394, %v379
        %v396 = vpop.permute.xlu0 %395
        %v398 = vperm.slane %v378, 1
        %v399 = vperm.slane %v378, 5
        %v402 = vperm.slane %v398, 1
        %v403 = vperm.slane %v399, 1
        %v404 = vmul.f32 %v396, %v402
        %v405 = vmul.f32 %v396, %v403
        %v406 = vadd.f32 %v392, %v404
        %v407 = vadd.f32 %v393, %v405
        %408 = vset.pattern.permute.xlu0 2
        %409 = vperm.xlu0 %408, %v379
        %v410 = vpop.permute.xlu0 %409
        %v412 = vperm.slane %v378, 2
        %v413 = vperm.slane %v378, 6
        %v416 = vperm.slane %v412, 2
        %v417 = vperm.slane %v413, 2
        %v418 = vmul.f32 %v410, %v416
        %v419 = vmul.f32 %v410, %v417
        %v420 = vadd.f32 %v406, %v418
        %v421 = vadd.f32 %v407, %v419
        %422 = vset.pattern.permute.xlu0 3
        %423 = vperm.xlu0 %422, %v379
        %v424 = vpop.permute.xlu0 %423
        %v426 = vperm.slane %v378, 3
        %v427 = vperm.slane %v378, 7
        %v430 = vperm.slane %v426, 3
        %v431 = vperm.slane %v427, 3
        %v432 = vmul.f32 %v424, %v430
        %v433 = vmul.f32 %v424, %v431
        %v434 = vadd.f32 %v420, %v432
        %v435 = vadd.f32 %v421, %v433
        %v436 = vld [vmem:[%s359] sm:$0xff]
        %v437 = vld [vmem:[%s3] sm:$0xff]
        %439 = vset.pattern.permute.xlu0 0
        %440 = vperm.xlu0 %439, %v437
        %v441 = vpop.permute.xlu0 %440
        %v444 = vperm.slane %v436, 0
        %v445 = vperm.slane %v436, 4
        %v448 = vperm.slane %v444, 0
        %v449 = vperm.slane %v445, 0
        %v450 = vmul.f32 %v441, %v448
        %v451 = vmul.f32 %v441, %v449
        %452 = vset.pattern.permute.xlu0 1
        %453 = vperm.xlu0 %452, %v437
        %v454 = vpop.permute.xlu0 %453
        %v456 = vperm.slane %v436, 1
        %v457 = vperm.slane %v436, 5
        %v460 = vperm.slane %v456, 1
        %v461 = vperm.slane %v457, 1
        %v462 = vmul.f32 %v454, %v460
        %v463 = vmul.f32 %v454, %v461
        %v464 = vadd.f32 %v450, %v462
        %v465 = vadd.f32 %v451, %v463
        %466 = vset.pattern.permute.xlu0 2
        %467 = vperm.xlu0 %466, %v437
        %v468 = vpop.permute.xlu0 %467
        %v470 = vperm.slane %v436, 2
        %v471 = vperm.slane %v436, 6
        %v474 = vperm.slane %v470, 2
        %v475 = vperm.slane %v471, 2
        %v476 = vmul.f32 %v468, %v474
        %v477 = vmul.f32 %v468, %v475
        %v478 = vadd.f32 %v464, %v476
        %v479 = vadd.f32 %v465, %v477
        %480 = vset.pattern.permute.xlu0 3
        %481 = vperm.xlu0 %480, %v437
        %v482 = vpop.permute.xlu0 %481
        %v484 = vperm.slane %v436, 3
        %v485 = vperm.slane %v436, 7
        %v488 = vperm.slane %v484, 3
        %v489 = vperm.slane %v485, 3
        %v490 = vmul.f32 %v482, %v488
        %v491 = vmul.f32 %v482, %v489
        %v492 = vadd.f32 %v478, %v490
        %v493 = vadd.f32 %v479, %v491
        // Predicated region
        $region53: #{tpu_custom_call.1} parent=47 // pred_check
          %p494 = pneg %p361
        $region54: #{tpu_custom_call.1} parent=47 // pred_check_branch
          %496 = sbr.rel (%p494) target = $region56
        $region55: #{tpu_custom_call.1} parent=47 // pred_region
          %v497 = vld [vmem:[#allocation2] sm:$0xff]
          %v498 = vadd.f32 %v434, %v435
          %499 = vadd.xlane.f32.xlu0 %v498
          %v500 = vpop.xlane.xlu0 %499
          %v501 = vadd.f32 %v497, %v500
          %vm502 = vcmask 7168
          %503 = vst.msk [vmem:[#allocation2] sm:$0xff] %vm502, %v501
          %v504 = vld [vmem:[#allocation3] sm:$0xff]
          %v505 = vmul.f32 %v434, %v434
          %v506 = vmul.f32 %v435, %v435
          %v507 = vadd.f32 %v505, %v506
          %508 = vadd.xlane.f32.xlu0 %v507
          %v509 = vpop.xlane.xlu0 %508
          %v510 = vadd.f32 %v504, %v509
          %511 = vst.msk [vmem:[#allocation3] sm:$0xff] %vm502, %v510
          %v512 = vld [vmem:[#allocation4] sm:$0xff]
          %v513 = vadd.f32 %v492, %v493
          %514 = vadd.xlane.f32.xlu0 %v513
          %v515 = vpop.xlane.xlu0 %514
          %v516 = vadd.f32 %v512, %v515
          %517 = vst.msk [vmem:[#allocation4] sm:$0xff] %vm502, %v516
          %v518 = vld [vmem:[#allocation5] sm:$0xff]
          %v519 = vmul.f32 %v492, %v492
          %v520 = vmul.f32 %v493, %v493
          %v521 = vadd.f32 %v519, %v520
          %522 = vadd.xlane.f32.xlu0 %v521
          %v523 = vpop.xlane.xlu0 %522
          %v524 = vadd.f32 %v518, %v523
          %525 = vst.msk [vmem:[#allocation5] sm:$0xff] %vm502, %v524
        $region56: #{tpu_custom_call.1} parent=47 // pred_fallthru
          _
        %p526 = scmp.eq.s32.totalorder %s26, 1
        // Predicated region
        $region57: #{tpu_custom_call.1} parent=47 // pred_check
          %p527 = pneg %p526
        $region58: #{tpu_custom_call.1} parent=47 // pred_check_branch
          %529 = sbr.rel (%p527) target = $region60
        $region59: #{tpu_custom_call.1} parent=47 // pred_region
          %v530 = vld [vmem:[%s5] sm:$0xff]
          %v531 = vld [vmem:[#allocation2] sm:$0xff]
          %v532 = vmul.f32 %v531, 0.001953125
          %v533 = vld [vmem:[#allocation3] sm:$0xff]
          %v534 = vmul.f32 %v533, 0.001953125
          %v535 = vmul.f32 %v532, %v532
          %v536 = vsub.f32 %v534, %v535
          %v537 = vadd.f32 %v536, 1e-05
          %v538 = vrsqrt.pop %v537
          %v539 = vmul.f32 %v538, %v537
          %v540 = vmul.f32 %v539, %v538
          %v541 = vmul.f32 0.5, %v540
          %v542 = vsub.f32 1.5, %v541
          %v543 = vmul.f32 %v538, %v542
          %vm544 = vweird.f32 %v537
          %vm545 = vweird.f32 %v538
          %vm546 = vmor %vm544, %vm545
          %v547 = vsel %vm546, %v538, %v543
          %v548 = vmul.f32 %v530, %v547
          %v549 = vmul.f32 %v532, %v548
          %551 = vrot.lane.b32.xlu0 %v549, 1
          %v552 = vpop.permute.xlu0 %551
          %v554 = vsub.f32 %v530, %v552
          %v555 = vld [vmem:[#allocation4] sm:$0xff]
          %v556 = vmul.f32 %v555, 0.001953125
          %v557 = vld [vmem:[#allocation5] sm:$0xff]
          %v558 = vmul.f32 %v557, 0.001953125
          %v559 = vmul.f32 %v556, %v556
          %v560 = vsub.f32 %v558, %v559
          %v561 = vadd.f32 %v560, 1e-05
          %v562 = vrsqrt.pop %v561
          %v563 = vmul.f32 %v562, %v561
          %v564 = vmul.f32 %v563, %v562
          %v565 = vmul.f32 0.5, %v564
          %v566 = vsub.f32 1.5, %v565
          %v567 = vmul.f32 %v562, %v566
          %vm568 = vweird.f32 %v561
          %vm569 = vweird.f32 %v562
          %vm570 = vmor %vm568, %vm569
          %v571 = vsel %vm570, %v562, %v567
          %573 = vrot.lane.b32.xlu0 %v571, 2
          %v574 = vpop.permute.xlu0 %573
          %v576 = vmul.f32 %v530, %v574
          %578 = vrot.lane.b32.xlu0 %v576, 126
          %v579 = vpop.permute.xlu0 %578
          %v581 = vmul.f32 %v556, %v579
          %583 = vrot.lane.b32.xlu0 %v581, 3
          %v584 = vpop.permute.xlu0 %583
          %v586 = vsub.f32 %v530, %v584
          %588 = vset.pattern.permute.xlu0 0
          %589 = vperm.xlu0 %588, %v548
          %v590 = vpop.permute.xlu0 %589
          %v592 = vmul.f32 %v434, %v590
          %v593 = vmul.f32 %v435, %v590
          %595 = vset.pattern.permute.xlu0 1
          %596 = vperm.xlu0 %595, %v554
          %v597 = vpop.permute.xlu0 %596
          %v599 = vadd.f32 %v592, %v597
          %v600 = vadd.f32 %v593, %v597
          %601 = vset.pattern.permute.xlu0 2
          %602 = vperm.xlu0 %601, %v576
          %v603 = vpop.permute.xlu0 %602
          %v605 = vmul.f32 %v492, %v603
          %v606 = vmul.f32 %v493, %v603
          %v607 = vadd.f32 %v599, %v605
          %v608 = vadd.f32 %v600, %v606
          %610 = vset.pattern.permute.xlu0 3
          %611 = vperm.xlu0 %610, %v586
          %v612 = vpop.permute.xlu0 %611
          %v614 = vadd.f32 %v607, %v612
          %v615 = vadd.f32 %v608, %v612
          %v616 = vmax.f32 %v614, 0.0
          %v617 = vmax.f32 %v615, 0.0
          %v618 = vld [vmem:[%s4] sm:$0xff]
          %620 = vset.pattern.permute.xlu0 0
          %621 = vperm.xlu0 %620, %v618
          %v622 = vpop.permute.xlu0 %621
          %v624 = vmul.f32 %v616, %v622
          %v625 = vmul.f32 %v617, %v622
          %v626 = vrot.slane %v624, 4
          %v627 = vadd.f32 %v624, %v626
          %v628 = vrot.slane %v627, 2
          %v629 = vadd.f32 %v627, %v628
          %v630 = vrot.slane %v629, 1
          %v631 = vadd.f32 %v629, %v630
          %v632 = vrot.slane %v625, 4
          %v633 = vadd.f32 %v625, %v632
          %v634 = vrot.slane %v633, 2
          %v635 = vadd.f32 %v633, %v634
          %v636 = vrot.slane %v635, 1
          %v637 = vadd.f32 %v635, %v636
          %v638 = vld [vmem:[#allocation6] sm:$0x1]
          %v639 = vadd.f32 %v631, %v637
          %640 = vadd.xlane.f32.xlu0 %v639
          %v641 = vpop.xlane.xlu0 %640
          %v642 = vadd.f32 %v638, %v641
          %vm643 = vcmask 0
          %644 = vst.msk [vmem:[#allocation6] sm:$0x1] %vm643, %v642
          %v645 = vld [vmem:[#allocation7] sm:$0x1]
          %v646 = vmul.f32 %v631, %v631
          %v647 = vmul.f32 %v637, %v637
          %v648 = vadd.f32 %v646, %v647
          %649 = vadd.xlane.f32.xlu0 %v648
          %v650 = vpop.xlane.xlu0 %649
          %v651 = vadd.f32 %v645, %v650
          %652 = vst.msk [vmem:[#allocation7] sm:$0x1] %vm643, %v651
          %p653 = scmp.eq.s32.totalorder %s27, 1
          %p654 = pnand %p653, %p365
          %p655 = pneg %p654
          // Predicated region
          $region61: #{tpu_custom_call.1} parent=59 // pred_check
            _
          $region62: #{tpu_custom_call.1} parent=59 // pred_check_branch
            %657 = sbr.rel (%p654) target = $region64
          $region63: #{tpu_custom_call.1} parent=59 // pred_region
            %v658 = vld [vmem:[%s6] sm:$0x1]
            %v659 = vld [vmem:[#allocation6] sm:$0x1]
            %v660 = vmul.f32 %v659, 0.001953125
            %v661 = vld [vmem:[#allocation7] sm:$0x1]
            %v662 = vmul.f32 %v661, 0.001953125
            %v663 = vmul.f32 %v660, %v660
            %v664 = vsub.f32 %v662, %v663
            %v665 = vadd.f32 %v664, 1e-05
            %v666 = vrsqrt.pop %v665
            %v667 = vmul.f32 %v666, %v665
            %v668 = vmul.f32 %v667, %v666
            %v669 = vmul.f32 0.5, %v668
            %v670 = vsub.f32 1.5, %v669
            %v671 = vmul.f32 %v666, %v670
            %vm672 = vweird.f32 %v665
            %vm673 = vweird.f32 %v666
            %vm674 = vmor %vm672, %vm673
            %v675 = vsel %vm674, %v666, %v671
            %v676 = vmul.f32 %v658, %v675
            %v677 = vmul.f32 %v660, %v676
            %679 = vrot.lane.b32.xlu0 %v677, 1
            %v680 = vpop.permute.xlu0 %679
            %v682 = vsub.f32 %v658, %v680
            %vm683 = vcmask 7168
            %684 = vst.msk [vmem:[%s7] sm:$0xff] %vm683, %v548
            %vm685 = vcmask 15368
            %686 = vst.msk [vmem:[%s7] sm:$0xff] %vm685, %v554
            %vm687 = vcmask 23568
            %688 = vst.msk [vmem:[%s7] sm:$0xff] %vm687, %v576
            %vm689 = vcmask 31768
            %690 = vst.msk [vmem:[%s7] sm:$0xff] %vm689, %v586
            %691 = vst.msk [vmem:[#allocation8] sm:$0x1] %vm643, %v676
            %vm692 = vcmask 8200
            %693 = vst.msk [vmem:[#allocation8] sm:$0x1] %vm692, %v682
          $region64: #{tpu_custom_call.1} parent=59 // pred_fallthru
            _
        $region60: #{tpu_custom_call.1} parent=47 // pred_fallthru
          _
        // Predicated region
        $region65: #{tpu_custom_call.1} parent=47 // pred_check
          %p694 = pneg %p214
        $region66: #{tpu_custom_call.1} parent=47 // pred_check_branch
          %696 = sbr.rel (%p694) target = $region68
        $region67: #{tpu_custom_call.1} parent=47 // pred_region
          _
        $region68: #{tpu_custom_call.1} parent=47 // pred_fallthru
          _
        // Predicated region
        $region69: #{tpu_custom_call.1} parent=47 // pred_check
          %p697 = pneg %p235
        $region70: #{tpu_custom_call.1} parent=47 // pred_check_branch
          %699 = sbr.rel (%p697) target = $region72
        $region71: #{tpu_custom_call.1} parent=47 // pred_region
          %701 = vsyncadd [#allocation9], 0
          %s703 = sshll.u32 [#allocation8], 4
          %s704 = int_to_ptr.vmem [resolvable:$true] %s703
          %s705 = sshll.u32 %s8, 4
          %s706 = int_to_ptr.hbm [resolvable:$true] %s705
          %708 = dma.vmem_to_hbm [thread:$0]  %s704, 16, %s706, [#allocation9]
        $region72: #{tpu_custom_call.1} parent=47 // pred_fallthru
          _
        // Predicated region
        $region73: #{tpu_custom_call.1} parent=47 // pred_check
          %p709 = pneg %p214
        $region74: #{tpu_custom_call.1} parent=47 // pred_check_branch
          %711 = sbr.rel (%p709) target = $region76
        $region75: #{tpu_custom_call.1} parent=47 // pred_region
          _
        $region76: #{tpu_custom_call.1} parent=47 // pred_fallthru
          _
        // Predicated region
        $region77: #{tpu_custom_call.1} parent=47 // pred_check
          %p712 = pneg %p235
        $region78: #{tpu_custom_call.1} parent=47 // pred_check_branch
          %714 = sbr.rel (%p712) target = $region80
        $region79: #{tpu_custom_call.1} parent=47 // pred_region
          %716 = dma.done [#allocation9], 16
        $region80: #{tpu_custom_call.1} parent=47 // pred_fallthru
          _
      $region48: #{tpu_custom_call.1} parent=5 // pred_fallthru
        _
      %p717 = scmp.le.s32.totalorder 2, %s16
      // Predicated region
      $region81: #{tpu_custom_call.1} parent=5 // pred_check
        %p718 = pneg %p717
      $region82: #{tpu_custom_call.1} parent=5 // pred_check_branch
        %720 = sbr.rel (%p718) target = $region84
      $region83: #{tpu_custom_call.1} parent=5 // pred_region
        %s721 = ssub.s32 %s16, 2
      $region84: #{tpu_custom_call.1} parent=5 // pred_fallthru
        _
    $region6: #{tpu_custom_call.1} parent=1 // loop_footer
      %s20 = sadd.s32 1, %s16
    $region7: #{tpu_custom_call.1} parent=1 // loop_footer_branch
      %15 = sbr.rel target = $region3
    $region8: #{tpu_custom_call.1} parent=1 // loop_exit
      _
    %722 = vsyncpa [#allocation9], 1
    %s723 = scalar_lea.sflag [#allocation9], 1
    %724 = vsyncpa %s723, 1

</llo_original>
